<compile_context>
chip_gen: v7x
topology: tpu7x:2x2x1
jax: 0.10.0
libtpu: 0.0.40
codegen_flags: <defaults>
</compile_context>

<pallas_src>
import functools

import jax
import jax.numpy as jnp
from jax.experimental import pallas as pl
from jax.experimental.pallas import tpu as pltpu

_EPS = 1e-5
_LANE = 128


# ----------------------------- kernels ---------------------------------------


def _ln_relu(h, gamma, beta, f_valid):
    """One-pass LayerNorm stats + affine + ReLU on a (tb, F_out_pad) f32 tile.

    Padded feature columns of `h` are exactly zero (zero-padded weight
    columns), so the sums over the padded width equal the sums over the true
    width; only the divisor uses the true feature count `f_valid`.
    """
    inv = 1.0 / float(f_valid)
    s1 = jnp.sum(h, axis=-1, keepdims=True)
    s2 = jnp.sum(h * h, axis=-1, keepdims=True)
    mean = s1 * inv
    var = s2 * inv - mean * mean
    hn = (h - mean) * jax.lax.rsqrt(var + _EPS)          # rsqrt -> EUP slot
    return jnp.maximum(hn * gamma + beta, 0.0)


def _mlp_k1_kernel(x_ref, w_ref, g_ref, b_ref, o_ref, *, f_valid):
    """Whole-K: out = ReLU(LayerNorm(x @ W)). No accumulator scratch."""
    h = jnp.dot(x_ref[...], w_ref[...], preferred_element_type=jnp.float32)
    y = _ln_relu(h, g_ref[...].astype(jnp.float32),
                 b_ref[...].astype(jnp.float32), f_valid)
    o_ref[...] = y.astype(o_ref.dtype)


def _mlp_k1_res_kernel(scale_ref, x_ref, w_ref, g_ref, b_ref, r_ref, o_ref, *,
                       f_valid):
    """Whole-K: out = ReLU(LayerNorm(x @ W)) + scale * res. scale in SMEM."""
    h = jnp.dot(x_ref[...], w_ref[...], preferred_element_type=jnp.float32)
    y = _ln_relu(h, g_ref[...].astype(jnp.float32),
                 b_ref[...].astype(jnp.float32), f_valid)
    y = y + scale_ref[0] * r_ref[...].astype(jnp.float32)
    o_ref[...] = y.astype(o_ref.dtype)


def _mlp_acc_kernel(x_ref, w_ref, g_ref, b_ref, o_ref, acc_ref, *, f_valid):
    """K-tiled: accumulate x @ W, finalize with LayerNorm + ReLU."""
    k = pl.program_id(1)
    p = jnp.dot(x_ref[...], w_ref[...], preferred_element_type=jnp.float32)

    @pl.when(k == 0)
    def _():
        acc_ref[...] = p              # first slab: write, no zero-fill + add

    @pl.when(k > 0)
    def _():
        acc_ref[...] += p

    @pl.when(k == pl.num_programs(1) - 1)
    def _():
        y = _ln_relu(acc_ref[...], g_ref[...].astype(jnp.float32),
                     b_ref[...].astype(jnp.float32), f_valid)
        o_ref[...] = y.astype(o_ref.dtype)


def _mlp_acc_res_kernel(scale_ref, x_ref, w_ref, g_ref, b_ref, r_ref, o_ref,
                        acc_ref, *, f_valid):
    """K-tiled with residual: finalize adds scale * res (scale in SMEM)."""
    k = pl.program_id(1)
    p = jnp.dot(x_ref[...], w_ref[...], preferred_element_type=jnp.float32)

    @pl.when(k == 0)
    def _():
        acc_ref[...] = p

    @pl.when(k > 0)
    def _():
        acc_ref[...] += p

    @pl.when(k == pl.num_programs(1) - 1)
    def _():
        y = _ln_relu(acc_ref[...], g_ref[...].astype(jnp.float32),
                     b_ref[...].astype(jnp.float32), f_valid)
        y = y + scale_ref[0] * r_ref[...].astype(jnp.float32)
        o_ref[...] = y.astype(o_ref.dtype)


# --------------------------- host-side helpers --------------------------------


def _round_up(v, m):
    return (v + m - 1) // m * m


def _vmem_limit_bytes():
    """Generation-aware scoped-VMEM limit (v5e/v6e: 128 MiB phys, v7x: 64 MiB/TC)."""
    try:
        cap = int(pltpu.get_tpu_info().vmem_capacity_bytes)
    except Exception:
        cap = 64 << 20                      # conservative fallback
    if cap <= (64 << 20):
        return 40 << 20                     # v7x: leave headroom for Mosaic scratch
    return 100 << 20                        # v5e / v6e


def _select_tiles(b, f_in, f_out_pad, x_bytes, w_bytes, out_bytes, res_bytes,
                  budget, tb_req):
    """Pick (tb, tk, kt) from the VMEM budget."""
    # K tile: keep the whole weight slab resident whenever it fits, so W is
    # fetched from HBM exactly once per call (index_map constant).
    if f_in % _LANE != 0 or 2 * f_in * f_out_pad * w_bytes <= budget // 2:
        tk = f_in
    else:
        tk = None
        # Prefer 256-multiples (v6e/v7x 2x256 MXU); 128 only as a last resort.
        for cand in (4096, 2048, 1024, 512, 256, 128):
            if f_in % cand == 0 and 2 * cand * f_out_pad * w_bytes <= budget // 2:
                tk = cand
                break
        if tk is None:
            tk = 128
    kt = f_in // tk

    # Row tile: as big as the remaining budget allows, but keep >= 2 row
    # blocks so the "parallel" batch axis shards across v7x's 2 TensorCores.
    w_vmem = 2 * tk * f_out_pad * w_bytes
    per_row = 2 * tk * x_bytes + 2 * f_out_pad * out_bytes
    if res_bytes:
        per_row += 2 * f_out_pad * res_bytes
    if kt > 1:
        per_row += f_out_pad * 4            # f32 accumulator scratch
    tb = 512 if tb_req is None else int(tb_req)
    tb = min(tb, max(16, (budget - w_vmem) // max(per_row, 1)))
    if b >= 32:
        tb = min(tb, _round_up(pl.cdiv(b, 2), 16))
    if tb >= b:
        tb = b                              # single full-dim block (always legal)
    else:
        tb = max(16, (tb // 16) * 16)       # bf16 sublane packing
    return tb, tk, kt


def _fit_cols(v, n_keep, n_total):
    """Keep the first n_keep columns, zero-pad to n_total columns."""
    v = v[:, :n_keep]
    if v.shape[1] < n_total:
        v = jnp.pad(v, ((0, 0), (0, n_total - v.shape[1])))
    return v


def prepare_params(w, gamma, beta, compute_dtype=None):
    """One-time parameter prep.

    * Pre-transposes W (F_out, F_in) -> (F_in, F_out).
    * Zero-pads F_in / F_out to lane multiples (128): lane-dense stores, full
      MXU depth, and tileable K; true widths are recorded so the output can be
      sliced back.
    * compute_dtype=jnp.bfloat16 (with bf16 activations) gives ~3-6x MXU
      throughput vs f32 operands.
    """
    w = jnp.asarray(w)
    f_out_true, f_in_true = w.shape
    w_t = w.T
    if compute_dtype is not None:
        w_t = w_t.astype(compute_dtype)
    f_in_pad = _round_up(f_in_true, _LANE)
    f_out_pad = _round_up(f_out_true, _LANE)
    if (f_in_pad, f_out_pad) != (f_in_true, f_out_true):
        w_t = jnp.pad(w_t, ((0, f_in_pad - f_in_true),
                            (0, f_out_pad - f_out_true)))
    gamma = jnp.asarray(gamma, jnp.float32).reshape(1, -1)
    beta = jnp.asarray(beta, jnp.float32).reshape(1, -1)
    if f_out_pad != f_out_true:
        gamma = jnp.pad(gamma, ((0, 0), (0, f_out_pad - f_out_true)))
        beta = jnp.pad(beta, ((0, 0), (0, f_out_pad - f_out_true)))
    return {"w_t": w_t, "gamma": gamma, "beta": beta,
            "f_in": f_in_true, "f_out": f_out_true}


def _run_body(x2d, w_t, gamma, beta, f_out_true, res2d, scale, tb_req):
    """Invoke the fused kernel on 2-D (B, F_in_true) input."""
    b = x2d.shape[0]
    f_in, f_out_pad = w_t.shape
    if x2d.shape[1] != f_in:                # params were F_in-padded: pad x once
        x2d = jnp.pad(x2d, ((0, 0), (0, f_in - x2d.shape[1])))
    out_dtype = x2d.dtype

    vmem_limit = _vmem_limit_bytes()
    budget = int(vmem_limit * 0.85)
    res_bytes = res2d.dtype.itemsize if res2d is not None else 0
    tb, tk, kt = _select_tiles(b, f_in, f_out_pad,
                               x2d.dtype.itemsize, w_t.dtype.itemsize,
                               jnp.dtype(out_dtype).itemsize, res_bytes,
                               budget, tb_req)
    nb = pl.cdiv(b, tb)                     # ragged last block: no host row pad

    out_shape = jax.ShapeDtypeStruct((b, f_out_pad), out_dtype)

    if kt == 1:
        grid = (nb,)
        dims = ("parallel",)
        x_spec = pl.BlockSpec((tb, tk), lambda i: (i, 0))
        w_spec = pl.BlockSpec((tk, f_out_pad), lambda i: (0, 0))
        g_spec = pl.BlockSpec((1, f_out_pad), lambda i: (0, 0))
        o_spec = pl.BlockSpec((tb, f_out_pad), lambda i: (i, 0))
        r_spec = pl.BlockSpec((tb, f_out_pad), lambda i: (i, 0))
        scratch = []
        kern = _mlp_k1_res_kernel if res2d is not None else _mlp_k1_kernel
    else:
        grid = (nb, kt)
        dims = ("parallel", "arbitrary")
        x_spec = pl.BlockSpec((tb, tk), lambda i, k: (i, k))
        w_spec = pl.BlockSpec((tk, f_out_pad), lambda i, k: (k, 0))
        g_spec = pl.BlockSpec((1, f_out_pad), lambda i, k: (0, 0))
        o_spec = pl.BlockSpec((tb, f_out_pad), lambda i, k: (i, 0))
        r_spec = pl.BlockSpec((tb, f_out_pad), lambda i, k: (i, 0))
        scratch = [pltpu.VMEM((tb, f_out_pad), jnp.float32)]
        kern = _mlp_acc_res_kernel if res2d is not None else _mlp_acc_kernel

    kern = functools.partial(kern, f_valid=f_out_true)
    compiler_params = pltpu.CompilerParams(
        dimension_semantics=dims, vmem_limit_bytes=vmem_limit)

    if res2d is None:
        out = pl.pallas_call(
            kern, out_shape=out_shape, grid=grid,
            in_specs=[x_spec, w_spec, g_spec, g_spec],
            out_specs=o_spec, scratch_shapes=scratch,
            compiler_params=compiler_params,
        )(x2d, w_t, gamma, beta)
    else:
        scale_arr = jnp.asarray(scale, jnp.float32).reshape(1)
        s_spec = pl.BlockSpec(memory_space=pltpu.MemorySpace.SMEM)
        out = pl.pallas_call(
            kern, out_shape=out_shape, grid=grid,
            in_specs=[s_spec, x_spec, w_spec, g_spec, g_spec, r_spec],
            out_specs=o_spec, scratch_shapes=scratch,
            compiler_params=compiler_params,
        )(scale_arr, x2d, w_t, gamma, beta, res2d)

    if f_out_pad != f_out_true:
        out = out[:, :f_out_true]
    return out


def mlp_block_forward(x, params, residuals=None, acc=None, n_acc=None, *,
                      tb=None):
    """Forward pass of MLPBlock.

    Args:
      x: (batch..., F_in) array.
      params: dict from prepare_params() -- 'w_t', 'gamma', 'beta', 'f_out'.
              (A PyTorch-layout 'w' (F_out, F_in) is also accepted.)
      residuals: None | 'simple' | 'hyper'.
      acc, n_acc: accumulation buffer / counter for 'hyper' residuals.
      tb: optional row-tile override (auto-selected from VMEM budget if None).

    Returns:
      y for residuals None/'simple';  (y, acc, n_acc) for 'hyper'.
    """
    if "w_t" not in params:
        params = prepare_params(params["w"], params["gamma"], params["beta"])
    w_t, gamma, beta = params["w_t"], params["gamma"], params["beta"]
    f_out_true = params.get("f_out", w_t.shape[1])
    f_out_pad = w_t.shape[1]

    lead = x.shape[:-1]
    x_w = x.shape[-1]
    x2d = x.reshape(-1, x_w)

    if residuals is None:
        y = _run_body(x2d, w_t, gamma, beta, f_out_true, None, None, tb)
        return y.reshape(lead + (f_out_true,))

    if residuals == "simple":
        n_res = min(x_w, f_out_true)                 # y[..., :n] += x[..., :n]
        res2d = _fit_cols(x2d, n_res, f_out_pad)
        y = _run_body(x2d, w_t, gamma, beta, f_out_true, res2d, 1.0, tb)
        return y.reshape(lead + (f_out_true,))

    # residuals == 'hyper': accumulation bookkeeping is cheap elementwise glue
    # in plain JAX; the fused kernel does y += acc[..., :n] / n_acc via SMEM scale.
    if acc is None:
        acc2d = x2d
        n_acc = 1
        n_keep = x_w
    else:
        acc2d = acc.reshape(-1, acc.shape[-1])
        n_keep = min(acc2d.shape[-1], x_w)
        acc2d = acc2d.at[:, :n_keep].add(x2d[:, :n_keep].astype(acc2d.dtype))
        n_acc = n_acc + 1
    n_res = min(f_out_true, n_keep)
    res2d = _fit_cols(acc2d, n_res, f_out_pad)
    y = _run_body(x2d, w_t, gamma, beta, f_out_true, res2d, 1.0 / n_acc, tb)
    acc_out = acc2d.reshape(lead + (acc2d.shape[-1],))
    return y.reshape(lead + (f_out_true,)), acc_out, n_acc


# ----------------------- pure-JAX reference for checking ----------------------


def _ref_forward(x, w, gamma, beta):
    """body(x) with W in PyTorch layout (F_out, F_in), f32, HIGHEST precision."""
    h = jnp.dot(x.astype(jnp.float32), jnp.asarray(w, jnp.float32).T,
                precision=jax.lax.Precision.HIGHEST)
    mean = jnp.mean(h, axis=-1, keepdims=True)
    var = jnp.mean(jnp.square(h - mean), axis=-1, keepdims=True)
    hn = (h - mean) / jnp.sqrt(var + _EPS)
    hn = hn * jnp.asarray(gamma, jnp.float32).reshape(1, -1) \
            + jnp.asarray(beta, jnp.float32).reshape(1, -1)
    return jnp.maximum(hn, 0.0)


if __name__ == "__main__":
    key = jax.random.PRNGKey(0)
    ks = jax.random.split(key, 10)

    # ---- aligned shapes: batch=64, F_in=F_out=128 (lane-dense) ----
    batch, f_in, f_out = 64, 128, 128
    x = jax.random.normal(ks[0], (batch, f_in), jnp.float32)
    w = jax.random.normal(ks[1], (f_out, f_in), jnp.float32) * 0.1
    gamma = 1.0 + 0.1 * jax.random.normal(ks[2], (f_out,), jnp.float32)
    beta = 0.1 * jax.random.normal(ks[3], (f_out,), jnp.float32)

    params = prepare_params(w, gamma, beta)
    ref0 = _ref_forward(x, w, gamma, beta)

    # residuals = None
    y0 = jax.block_until_ready(mlp_block_forward(x, params, residuals=None))
    assert jnp.allclose(y0, ref0, atol=2e-3, rtol=2e-3), "None path mismatch"

    # residuals = 'simple'
    y1 = jax.block_until_ready(mlp_block_forward(x, params, residuals="simple"))
    assert jnp.allclose(y1, ref0 + x, atol=2e-3, rtol=2e-3), "simple mismatch"

    # residuals = 'hyper' (first call: no accumulation buffer yet)
    y2, acc, n_acc = mlp_block_forward(x, params, residuals="hyper")
    y2 = jax.block_until_ready(y2)
    assert jnp.allclose(y2, ref0 + x, atol=2e-3, rtol=2e-3), "hyper(1) mismatch"
    assert n_acc == 1

    # residuals = 'hyper' second call with (x', acc, n_acc) semantics
    x2 = jax.random.normal(ks[4], (batch, f_out), jnp.float32)
    w2 = jax.random.normal(ks[5], (f_out, f_out), jnp.float32) * 0.1
    params2 = prepare_params(w2, jnp.ones((f_out,), jnp.float32),
                             jnp.zeros((f_out,), jnp.float32))
    y3, acc3, n_acc3 = mlp_block_forward(x2, params2, residuals="hyper",
                                         acc=acc, n_acc=n_acc)
    y3 = jax.block_until_ready(y3)
    ref3 = _ref_forward(x2, w2, jnp.ones((f_out,)), jnp.zeros((f_out,)))
    ref3 = ref3 + (acc + x2) / 2.0
    assert jnp.allclose(y3, ref3, atol=2e-3, rtol=2e-3), "hyper(2) mismatch"
    assert jnp.allclose(acc3, acc + x2, atol=1e-5, rtol=1e-5)
    assert n_acc3 == 2

    # ---- bf16 fast path: native-dtype MXU operands, f32 accumulation ----
    xb = x.astype(jnp.bfloat16)
    params_b = prepare_params(w, gamma, beta, compute_dtype=jnp.bfloat16)
    yb = jax.block_until_ready(mlp_block_forward(xb, params_b, residuals=None))
    w_b = w.astype(jnp.bfloat16).astype(jnp.float32)
    refb = _ref_forward(xb.astype(jnp.float32), w_b, gamma, beta)
    assert jnp.allclose(yb.astype(jnp.float32), refb, atol=3e-2, rtol=3e-2), \
        "bf16 path mismatch"

    # ---- unaligned shapes: F_in=96 -> pad 128, F_out=80 -> pad 128 (masked
    # LN divisor), ragged batch=50 (no host row padding) ----
    b3, fi3, fo3 = 50, 96, 80
    x3 = jax.random.normal(ks[6], (b3, fi3), jnp.float32)
    w3 = jax.random.normal(ks[7], (fo3, fi3), jnp.float32) * 0.1
    g3 = 1.0 + 0.1 * jax.random.normal(ks[8], (fo3,), jnp.float32)
    bt3 = 0.1 * jax.random.normal(ks[9], (fo3,), jnp.float32)
    params3 = prepare_params(w3, g3, bt3)
    y4 = jax.block_until_ready(mlp_block_forward(x3, params3,
                                                 residuals="simple"))
    ref4 = _ref_forward(x3, w3, g3, bt3) + x3[:, :fo3]   # n = min(96, 80)
    assert y4.shape == (b3, fo3)
    assert jnp.allclose(y4, ref4, atol=2e-3, rtol=2e-3), "unaligned mismatch"

    # TODO(synk): optionally cast f32 activations to bf16 inside the wrapper
    # (behind a flag) for full MXU throughput on f32 models.
    print("KERNEL_OK")
</pallas_src>

<mosaic_0001>
module attributes {stable_mosaic.version = 11 : i64} {
  func.func @_mlp_k1_kernel(%arg0: i32, %arg1: memref<32x128xf32, #tpu.memory_space<vmem>>, %arg2: memref<128x128xf32, #tpu.memory_space<vmem>>, %arg3: memref<1x128xf32, #tpu.memory_space<vmem>>, %arg4: memref<1x128xf32, #tpu.memory_space<vmem>>, %arg5: memref<32x128xf32, #tpu.memory_space<vmem>>) attributes {dimension_semantics = [#tpu.dimension_semantics<parallel>], iteration_bounds = array<i64: 2>, scalar_prefetch = 0 : i64, scratch_operands = 0 : i64, tpu.core_type = #tpu.core_type<tc>, window_params = [{transform_indices = @transform_0, window_bounds = array<i64: 32, 128>}, {pipeline_mode = #tpu.pipeline_mode<synchronous>, transform_indices = @transform_1, window_bounds = array<i64: 128, 128>}, {pipeline_mode = #tpu.pipeline_mode<synchronous>, transform_indices = @transform_2, window_bounds = array<i64: 1, 128>}, {pipeline_mode = #tpu.pipeline_mode<synchronous>, transform_indices = @transform_3, window_bounds = array<i64: 1, 128>}, {transform_indices = @transform_4, window_bounds = array<i64: 32, 128>}]} {
    %c0 = arith.constant 0 : index
    %c0_0 = arith.constant 0 : index
    %0 = vector.load %arg1[%c0, %c0_0] : memref<32x128xf32, #tpu.memory_space<vmem>>, vector<32x128xf32>
    %c0_1 = arith.constant 0 : index
    %c0_2 = arith.constant 0 : index
    %1 = vector.load %arg2[%c0_1, %c0_2] : memref<128x128xf32, #tpu.memory_space<vmem>>, vector<128x128xf32>
    %cst = arith.constant dense<0.000000e+00> : vector<32x128xf32>
    %2 = tpu.matmul %0, %1, %cst {dimension_numbers = #tpu.dot_dimension_numbers<[1], [0], [0], [1], [0, 0, 1, 1], [], []>} : vector<32x128xf32>, vector<128x128xf32>, vector<32x128xf32> -> vector<32x128xf32>
    %c0_3 = arith.constant 0 : index
    %c0_4 = arith.constant 0 : index
    %3 = vector.load %arg3[%c0_3, %c0_4] : memref<1x128xf32, #tpu.memory_space<vmem>>, vector<1x128xf32>
    %c0_5 = arith.constant 0 : index
    %c0_6 = arith.constant 0 : index
    %4 = vector.load %arg4[%c0_5, %c0_6] : memref<1x128xf32, #tpu.memory_space<vmem>>, vector<1x128xf32>
    %cst_7 = arith.constant dense<0.000000e+00> : vector<32xf32>
    %5 = vector.multi_reduction <add>, %2, %cst_7 [1] : vector<32x128xf32> to vector<32xf32>
    %6 = vector.shape_cast %5 : vector<32xf32> to vector<32x1xf32>
    %7 = arith.mulf %2, %2 : vector<32x128xf32>
    %cst_8 = arith.constant dense<0.000000e+00> : vector<32xf32>
    %8 = vector.multi_reduction <add>, %7, %cst_8 [1] : vector<32x128xf32> to vector<32xf32>
    %9 = vector.shape_cast %8 : vector<32xf32> to vector<32x1xf32>
    %cst_9 = arith.constant 7.812500e-03 : f32
    %10 = vector.broadcast %cst_9 : f32 to vector<32x1xf32>
    %11 = arith.mulf %6, %10 : vector<32x1xf32>
    %cst_10 = arith.constant 7.812500e-03 : f32
    %12 = vector.broadcast %cst_10 : f32 to vector<32x1xf32>
    %13 = arith.mulf %9, %12 : vector<32x1xf32>
    %14 = arith.mulf %11, %11 : vector<32x1xf32>
    %15 = arith.subf %13, %14 : vector<32x1xf32>
    %16 = vector.broadcast %11 : vector<32x1xf32> to vector<32x128xf32>
    %17 = arith.subf %2, %16 : vector<32x128xf32>
    %cst_11 = arith.constant 9.99999974E-6 : f32
    %18 = vector.broadcast %cst_11 : f32 to vector<32x1xf32>
    %19 = arith.addf %15, %18 : vector<32x1xf32>
    %20 = math.rsqrt %19 : vector<32x1xf32>
    %21 = vector.broadcast %20 : vector<32x1xf32> to vector<32x128xf32>
    %22 = arith.mulf %17, %21 : vector<32x128xf32>
    %23 = vector.broadcast %3 : vector<1x128xf32> to vector<32x128xf32>
    %24 = arith.mulf %22, %23 : vector<32x128xf32>
    %25 = vector.broadcast %4 : vector<1x128xf32> to vector<32x128xf32>
    %26 = arith.addf %24, %25 : vector<32x128xf32>
    %cst_12 = arith.constant 0.000000e+00 : f32
    %27 = vector.broadcast %cst_12 : f32 to vector<32x128xf32>
    %28 = arith.maximumf %26, %27 : vector<32x128xf32>
    %c0_13 = arith.constant 0 : index
    %c0_14 = arith.constant 0 : index
    %29 = vector.load %arg5[%c0_13, %c0_14] : memref<32x128xf32, #tpu.memory_space<vmem>>, vector<32x128xf32>
    tpu.vector_store %arg5[%c0_13, %c0_14], %28 {strides = array<i32>} : memref<32x128xf32, #tpu.memory_space<vmem>>, vector<32x128xf32>,
    return
  }
  func.func @transform_0(%arg0: i32) -> (i32, i32) {
    %c0_i32 = arith.constant 0 : i32
    %c0_i32_0 = arith.constant 0 : i32
    return %arg0, %c0_i32 : i32, i32
  }
  func.func @transform_1(%arg0: i32) -> (i32, i32) {
    %c0_i32 = arith.constant 0 : i32
    %c0_i32_0 = arith.constant 0 : i32
    %c0_i32_1 = arith.constant 0 : i32
    return %c0_i32, %c0_i32_0 : i32, i32
  }
  func.func @transform_2(%arg0: i32) -> (i32, i32) {
    %c0_i32 = arith.constant 0 : i32
    %c0_i32_0 = arith.constant 0 : i32
    %c0_i32_1 = arith.constant 0 : i32
    return %c0_i32, %c0_i32_0 : i32, i32
  }
  func.func @transform_3(%arg0: i32) -> (i32, i32) {
    %c0_i32 = arith.constant 0 : i32
    %c0_i32_0 = arith.constant 0 : i32
    %c0_i32_1 = arith.constant 0 : i32
    return %c0_i32, %c0_i32_0 : i32, i32
  }
  func.func @transform_4(%arg0: i32) -> (i32, i32) {
    %c0_i32 = arith.constant 0 : i32
    %c0_i32_0 = arith.constant 0 : i32
    return %arg0, %c0_i32 : i32, i32
  }
}

</mosaic_0001>

<llo_original>
// kernel: tpu_custom_call.1
$region0: #{tpu_custom_call.1}
  #allocation0 [shape = 'u32[]', space=smem, size = 0x4, offset = 0x4, fixed_abs, tag = 'smem constant byte address 0x4 - core index']
  #allocation1 [shape = 'u32[144,128]{1,0:T(1,128)}', space=vmem, size = 0x12000, scoped, tag = 'internal scratch']
  %s0 = inlined_call_operand.hbm [shape: f32[64,128], index: 0, kind: input, shape index: {}]
  %s1 = inlined_call_operand.hbm [shape: f32[128,128], index: 1, kind: input, shape index: {}]
  %s2 = inlined_call_operand.vmem [shape: f32[1,128], index: 2, kind: input, shape index: {}]
  %s3 = inlined_call_operand.vmem [shape: f32[1,128], index: 3, kind: input, shape index: {}]
  %s4 = inlined_call_operand.hbm [shape: f32[64,128], index: 4, kind: output, shape index: {}]
  %s5 = sld [smem:[#allocation0]]
  $region57: #{tpu_custom_call.1} parent=0
    _
  %s7 = ssub.s32 1, %s5
  %s8 = scalar_select 0, %s7, %s5
  $region1: #{tpu_custom_call.1} parent=0
    #allocation2 [shape = 'u8[32768]{0}', space=vmem, size = 0x8000, scoped, tag = 'input window, operand 0']
    #allocation3 [shape = 's32[2]{0}', space=sflag, size = 0x8, scoped, tag = 'scoped memory for tpu_custom_call.1']
    #allocation4 [shape = 's32[2]{0}', space=sflag, size = 0x8, scoped, tag = 'scoped memory for tpu_custom_call.1']
    #allocation5 [shape = 'u8[65536]{0}', space=vmem, size = 0x10000, scoped, tag = 'input window, operand 1, single buffered']
    #allocation6 [shape = 's32[1]{0}', space=sflag, size = 0x4, scoped, tag = 'scoped memory for tpu_custom_call.1']
    #allocation7 [shape = 'u8[32768]{0}', space=vmem, size = 0x8000, scoped, tag = 'output window, operand 0']
    %9 = vsyncpa [#allocation3], 0
    %s10 = scalar_lea.sflag [#allocation3], 1
    %11 = vsyncpa %s10, 0
    %12 = vsyncpa [#allocation6], 0
    %13 = vsyncpa [#allocation4], 0
    %s14 = scalar_lea.sflag [#allocation4], 1
    %15 = vsyncpa %s14, 0
    loop: start=0, step=1, limit=4
    $region2: #{tpu_custom_call.1} parent=1 // loop_pre_header
      _
    $region3: #{tpu_custom_call.1} parent=1 // loop_header
      %s17 = sphi 0, %s21
      %p18 = scmp.ge.s32.totalorder %s17, 4
      %s27 = sphi 0, %s29
      %s30 = sphi 0, %s27
      %s31 = sphi 0, %s30
      %s47 = sphi 0, %s31
      %s51 = sphi 0, %s51
      %s53 = sphi 0, %s51
      %s54 = sphi 0, %s53
      %s68 = sphi 0, %s54
      %s72 = sphi 0, %s72
      %s74 = sphi 0, %s72
      %s75 = sphi 0, %s74
      %s89 = sphi 0, %s75
      %s93 = sphi 0, %s93
      %s95 = sphi 0, %s93
      %s96 = sphi 0, %s95
      %s110 = sphi 0, %s96
      %s116 = sphi 0, %s118
      %s119 = sphi 0, %s116
      %s120 = sphi 0, %s119
      %s136 = sphi 0, %s120
    $region4: #{tpu_custom_call.1} parent=1 // loop_header_branch
      %20 = sbr.rel (%p18) target = $region8
    $region5: #{tpu_custom_call.1} parent=1 // loop_body
      %s22 = ssub.s32 %s17, 1
      %s23 = ssub.s32 %s17, 2
      %s24 = sadd.s32 %s17, 1
      %s25 = ssub.s32 %s17, %s24
      %p26 = scmp.eq.s32.totalorder %s25, 0
      %s28 = sadd.s32 %s27, 1
      %s29 = scalar_select %p26, %s27, %s28
      %p32 = pneg %p26
      %p33 = scmp.eq.s32.totalorder %s17, 1
      %p34 = por %p32, %p33
      %p35 = scmp.ne.s32.totalorder %s27, %s30
      %p36 = scmp.eq.s32.totalorder %s17, 0
      %p37 = por %p35, %p36
      %p38 = scmp.ne.s32.totalorder %s27, %s30
      %p39 = scmp.eq.s32.totalorder %s22, 1
      %p40 = por %p38, %p39
      %p41 = scmp.ne.s32.totalorder %s30, %s31
      %p42 = scmp.eq.s32.totalorder %s22, 0
      %p43 = por %p41, %p42
      %p44 = scmp.ne.s32.totalorder %s30, %s31
      %p45 = scmp.eq.s32.totalorder %s23, 1
      %p46 = por %p44, %p45
      %p48 = scmp.ne.s32.totalorder %s31, %s47
      %p49 = scmp.eq.s32.totalorder %s23, 0
      %p50 = por %p48, %p49
      %s52 = sadd.s32 %s51, 1
      %p55 = scmp.eq.s32.totalorder %s17, 1
      %p56 = scmp.ne.s32.totalorder %s51, %s53
      %p57 = scmp.eq.s32.totalorder %s17, 0
      %p58 = por %p56, %p57
      %p59 = scmp.ne.s32.totalorder %s51, %s53
      %p60 = scmp.eq.s32.totalorder %s22, 1
      %p61 = por %p59, %p60
      %p62 = scmp.ne.s32.totalorder %s53, %s54
      %p63 = scmp.eq.s32.totalorder %s22, 0
      %p64 = por %p62, %p63
      %p65 = scmp.ne.s32.totalorder %s53, %s54
      %p66 = scmp.eq.s32.totalorder %s23, 1
      %p67 = por %p65, %p66
      %p69 = scmp.ne.s32.totalorder %s54, %s68
      %p70 = scmp.eq.s32.totalorder %s23, 0
      %p71 = por %p69, %p70
      %s73 = sadd.s32 %s72, 1
      %p76 = scmp.eq.s32.totalorder %s17, 1
      %p77 = scmp.ne.s32.totalorder %s72, %s74
      %p78 = scmp.eq.s32.totalorder %s17, 0
      %p79 = por %p77, %p78
      %p80 = scmp.ne.s32.totalorder %s72, %s74
      %p81 = scmp.eq.s32.totalorder %s22, 1
      %p82 = por %p80, %p81
      %p83 = scmp.ne.s32.totalorder %s74, %s75
      %p84 = scmp.eq.s32.totalorder %s22, 0
      %p85 = por %p83, %p84
      %p86 = scmp.ne.s32.totalorder %s74, %s75
      %p87 = scmp.eq.s32.totalorder %s23, 1
      %p88 = por %p86, %p87
      %p90 = scmp.ne.s32.totalorder %s75, %s89
      %p91 = scmp.eq.s32.totalorder %s23, 0
      %p92 = por %p90, %p91
      %s94 = sadd.s32 %s93, 1
      %p97 = scmp.eq.s32.totalorder %s17, 1
      %p98 = scmp.ne.s32.totalorder %s93, %s95
      %p99 = scmp.eq.s32.totalorder %s17, 0
      %p100 = por %p98, %p99
      %p101 = scmp.ne.s32.totalorder %s93, %s95
      %p102 = scmp.eq.s32.totalorder %s22, 1
      %p103 = por %p101, %p102
      %p104 = scmp.ne.s32.totalorder %s95, %s96
      %p105 = scmp.eq.s32.totalorder %s22, 0
      %p106 = por %p104, %p105
      %p107 = scmp.ne.s32.totalorder %s95, %s96
      %p108 = scmp.eq.s32.totalorder %s23, 1
      %p109 = por %p107, %p108
      %p111 = scmp.ne.s32.totalorder %s96, %s110
      %p112 = scmp.eq.s32.totalorder %s23, 0
      %p113 = por %p111, %p112
      %s114 = ssub.s32 %s17, %s24
      %p115 = scmp.eq.s32.totalorder %s114, 0
      %s117 = sadd.s32 %s116, 1
      %s118 = scalar_select %p115, %s116, %s117
      %p121 = pneg %p115
      %p122 = scmp.eq.s32.totalorder %s17, 1
      %p123 = por %p121, %p122
      %p124 = scmp.ne.s32.totalorder %s116, %s119
      %p125 = scmp.eq.s32.totalorder %s17, 0
      %p126 = por %p124, %p125
      %p127 = scmp.ne.s32.totalorder %s116, %s119
      %p128 = scmp.eq.s32.totalorder %s22, 1
      %p129 = por %p127, %p128
      %p130 = scmp.ne.s32.totalorder %s119, %s120
      %p131 = scmp.eq.s32.totalorder %s22, 0
      %p132 = por %p130, %p131
      %p133 = scmp.ne.s32.totalorder %s119, %s120
      %p134 = scmp.eq.s32.totalorder %s23, 1
      %p135 = por %p133, %p134
      %p137 = scmp.ne.s32.totalorder %s120, %s136
      %p138 = scmp.eq.s32.totalorder %s23, 0
      %p139 = por %p137, %p138
      %p140 = scmp.le.s32.totalorder 1, %s17
      %p141 = scmp.lt.s32.totalorder %s17, 3
      %p142 = pnand %p140, %p141
      %p143 = pneg %p142
      // Predicated region
      $region9: #{tpu_custom_call.1} parent=5 // pred_check
        _
      $region10: #{tpu_custom_call.1} parent=5 // pred_check_branch
        %145 = sbr.rel (%p142) target = $region12
      $region11: #{tpu_custom_call.1} parent=5 // pred_region
        %s146 = ssub.s32 %s17, 1
        // Predicated region
        $region13: #{tpu_custom_call.1} parent=11 // pred_check
          %p147 = pneg %p64
        $region14: #{tpu_custom_call.1} parent=11 // pred_check_branch
          %149 = sbr.rel (%p147) target = $region16
        $region15: #{tpu_custom_call.1} parent=11 // pred_region
          %s151 = ssub.s32 2048, 2048
          %152 = vsyncadd [#allocation6], %s151
          %s153 = sshll.u32 [#allocation5], 4
          %s154 = int_to_ptr.vmem [resolvable:$true] %s153
          %159 = dma.hbm_to_vmem [thread:$0]  %s1, 2048, %s154, [#allocation6], 128, 128, 8
        $region16: #{tpu_custom_call.1} parent=11 // pred_fallthru
          _
        // Predicated region
        $region17: #{tpu_custom_call.1} parent=11 // pred_check
          %p160 = pneg %p85
        $region18: #{tpu_custom_call.1} parent=11 // pred_check_branch
          %162 = sbr.rel (%p160) target = $region20
        $region19: #{tpu_custom_call.1} parent=11 // pred_region
          _
        $region20: #{tpu_custom_call.1} parent=11 // pred_fallthru
          _
        // Predicated region
        $region21: #{tpu_custom_call.1} parent=11 // pred_check
          %p163 = pneg %p106
        $region22: #{tpu_custom_call.1} parent=11 // pred_check_branch
          %165 = sbr.rel (%p163) target = $region24
        $region23: #{tpu_custom_call.1} parent=11 // pred_region
          _
        $region24: #{tpu_custom_call.1} parent=11 // pred_fallthru
          _
      $region12: #{tpu_custom_call.1} parent=5 // pred_fallthru
        _
      %p166 = scmp.lt.s32.totalorder %s17, 2
      // Predicated region
      $region25: #{tpu_custom_call.1} parent=5 // pred_check
        %p167 = pneg %p166
      $region26: #{tpu_custom_call.1} parent=5 // pred_check_branch
        %169 = sbr.rel (%p167) target = $region28
      $region27: #{tpu_custom_call.1} parent=5 // pred_region
        // Predicated region
        $region29: #{tpu_custom_call.1} parent=27 // pred_check
          %p170 = pneg %p37
        $region30: #{tpu_custom_call.1} parent=27 // pred_check_branch
          %172 = sbr.rel (%p170) target = $region32
        $region31: #{tpu_custom_call.1} parent=27 // pred_region
          %s173 = sand.u32 %s27, 1
          %s174 = scalar_lea.sflag [#allocation3], %s173
          %s175 = sand.u32 %s27, 1
          %s176 = smul.addr %s175, 32
          %s177 = scalar_lea.vmem [#allocation2], %s176
          %s178 = smul.u32 4, %s17
          %s180 = ssub.s32 512, 512
          %181 = vsyncadd %s174, %s180
          %s182 = smul.addr %s178, 128
          %s183 = scalar_lea.hbm %s0, %s182
          %s184 = sshll.u32 %s177, 4
          %s185 = int_to_ptr.vmem [resolvable:$true] %s184
          %190 = dma.hbm_to_vmem [thread:$0]  %s183, 512, %s185, %s174, 128, 128, 8
        $region32: #{tpu_custom_call.1} parent=27 // pred_fallthru
          _
      $region28: #{tpu_custom_call.1} parent=5 // pred_fallthru
        _
      %p191 = scmp.le.s32.totalorder 1, %s17
      %p192 = scmp.lt.s32.totalorder %s17, 3
      %p193 = pnand %p191, %p192
      %p194 = pneg %p193
      // Predicated region
      $region33: #{tpu_custom_call.1} parent=5 // pred_check
        _
      $region34: #{tpu_custom_call.1} parent=5 // pred_check_branch
        %196 = sbr.rel (%p193) target = $region36
      $region35: #{tpu_custom_call.1} parent=5 // pred_region
        %s197 = ssub.s32 %s17, 1
        %s198 = sand.u32 %s30, 1
        %s199 = scalar_lea.sflag [#allocation3], %s198
        %s200 = sand.u32 %s30, 1
        %s201 = smul.addr %s200, 32
        %s202 = scalar_lea.vmem [#allocation2], %s201
        // Predicated region
        $region37: #{tpu_custom_call.1} parent=35 // pred_check
          %p203 = pneg %p43
        $region38: #{tpu_custom_call.1} parent=35 // pred_check_branch
          %205 = sbr.rel (%p203) target = $region40
        $region39: #{tpu_custom_call.1} parent=35 // pred_region
          %206 = dma.done %s199, 512
        $region40: #{tpu_custom_call.1} parent=35 // pred_fallthru
          _
        // Predicated region
        $region41: #{tpu_custom_call.1} parent=35 // pred_check
          %p207 = pneg %p64
        $region42: #{tpu_custom_call.1} parent=35 // pred_check_branch
          %209 = sbr.rel (%p207) target = $region44
        $region43: #{tpu_custom_call.1} parent=35 // pred_region
          %210 = dma.done [#allocation6], 2048
        $region44: #{tpu_custom_call.1} parent=35 // pred_fallthru
          _
        %s211 = sand.u32 %s30, 1
        %s212 = scalar_lea.sflag [#allocation3], %s211
        %s213 = sand.u32 %s30, 1
        %s214 = smul.addr %s213, 32
        %s215 = scalar_lea.vmem [#allocation2], %s214
        %p216 = pneg %p43
        %p217 = pneg %p40
        %p218 = pneg %p64
        %p219 = pneg %p61
        %p220 = pneg %p85
        %p221 = pneg %p82
        %p222 = pneg %p106
        %p223 = pneg %p103
        %p224 = pneg %p132
        %p225 = pneg %p129
        %s226 = sand.u32 %s119, 1
        %s227 = scalar_lea.sflag [#allocation4], %s226
        %s228 = sand.u32 %s119, 1
        %s229 = smul.addr %s228, 32
        %s230 = scalar_lea.vmem [#allocation7], %s229
        %s231 = smul.u32 4, %s22
        %s232 = smul.u32 4, %s22
        %v233 = vld [vmem:[%s202] sm:$0xff]
        %v234 = vld [vmem:[%s202 + $0x8] sm:$0xff]
        %v235 = vld [vmem:[%s202 + $0x10] sm:$0xff]
        %v236 = vld [vmem:[%s202 + $0x18] sm:$0xff]
        %v237 = vld [vmem:[#allocation5] sm:$0xff]
        %v238 = vld [vmem:[#allocation5 + $0x8] sm:$0xff]
        %v239 = vld [vmem:[#allocation5 + $0x10] sm:$0xff]
        %v240 = vld [vmem:[#allocation5 + $0x18] sm:$0xff]
        %v241 = vld [vmem:[#allocation5 + $0x20] sm:$0xff]
        %v242 = vld [vmem:[#allocation5 + $0x28] sm:$0xff]
        %v243 = vld [vmem:[#allocation5 + $0x30] sm:$0xff]
        %v244 = vld [vmem:[#allocation5 + $0x38] sm:$0xff]
        %v245 = vld [vmem:[#allocation5 + $0x40] sm:$0xff]
        %v246 = vld [vmem:[#allocation5 + $0x48] sm:$0xff]
        %v247 = vld [vmem:[#allocation5 + $0x50] sm:$0xff]
        %v248 = vld [vmem:[#allocation5 + $0x58] sm:$0xff]
        %v249 = vld [vmem:[#allocation5 + $0x60] sm:$0xff]
        %v250 = vld [vmem:[#allocation5 + $0x68] sm:$0xff]
        %v251 = vld [vmem:[#allocation5 + $0x70] sm:$0xff]
        %v252 = vld [vmem:[#allocation5 + $0x78] sm:$0xff]
        %253 = vmatprep.subr.mxu0 0.0
        %254 = vmatpush1.msra.mxu0 %v237
        %255 = vmatprep.subr.mxu0 0.0
        %256 = vmatpush1.msra.mxu0 %v238
        %257 = vmatprep.subr.mxu0 0.0
        %258 = vmatpush1.msra.mxu0 %v239
        %259 = vmatprep.subr.mxu0 0.0
        %260 = vmatpush1.msra.mxu0 %v240
        %261 = vmatprep.subr.mxu0 0.0
        %262 = vmatpush1.msra.mxu0 %v241
        %263 = vmatprep.subr.mxu0 0.0
        %264 = vmatpush1.msra.mxu0 %v242
        %265 = vmatprep.subr.mxu0 0.0
        %266 = vmatpush1.msra.mxu0 %v243
        %267 = vmatprep.subr.mxu0 0.0
        %268 = vmatpush1.msra.mxu0 %v244
        %269 = vmatprep.subr.mxu0 0.0
        %270 = vmatpush1.msra.mxu0 %v245
        %271 = vmatprep.subr.mxu0 0.0
        %272 = vmatpush1.msra.mxu0 %v246
        %273 = vmatprep.subr.mxu0 0.0
        %274 = vmatpush1.msra.mxu0 %v247
        %275 = vmatprep.subr.mxu0 0.0
        %276 = vmatpush1.msra.mxu0 %v248
        %277 = vmatprep.subr.mxu0 0.0
        %278 = vmatpush1.msra.mxu0 %v249
        %279 = vmatprep.subr.mxu0 0.0
        %280 = vmatpush1.msra.mxu0 %v250
        %281 = vmatprep.subr.mxu0 0.0
        %282 = vmatpush1.msra.mxu0 %v251
        %283 = vmatprep.subr.mxu0 0.0
        %284 = vmatpush1.msra.mxu0 %v252
        %285 = vmatprep.subr.mxu0 0.0
        %286 = vmatpush1.msra.mxu0 0.0
        %287 = vmatprep.subr.mxu0 0.0
        %288 = vmatpush1.msra.mxu0 0.0
        %289 = vmatprep.subr.mxu0 0.0
        %290 = vmatpush1.msra.mxu0 0.0
        %291 = vmatprep.subr.mxu0 0.0
        %292 = vmatpush1.msra.mxu0 0.0
        %293 = vmatprep.subr.mxu0 0.0
        %294 = vmatpush1.msra.mxu0 0.0
        %295 = vmatprep.subr.mxu0 0.0
        %296 = vmatpush1.msra.mxu0 0.0
        %297 = vmatprep.subr.mxu0 0.0
        %298 = vmatpush1.msra.mxu0 0.0
        %299 = vmatprep.subr.mxu0 0.0
        %300 = vmatpush1.msra.mxu0 0.0
        %301 = vmatprep.subr.mxu0 0.0
        %302 = vmatpush1.msra.mxu0 0.0
        %303 = vmatprep.subr.mxu0 0.0
        %304 = vmatpush1.msra.mxu0 0.0
        %305 = vmatprep.subr.mxu0 0.0
        %306 = vmatpush1.msra.mxu0 0.0
        %307 = vmatprep.subr.mxu0 0.0
        %308 = vmatpush1.msra.mxu0 0.0
        %309 = vmatprep.subr.mxu0 0.0
        %310 = vmatpush1.msra.mxu0 0.0
        %311 = vmatprep.subr.mxu0 0.0
        %312 = vmatpush1.msra.mxu0 0.0
        %313 = vmatprep.subr.mxu0 0.0
        %314 = vmatpush1.msra.mxu0 0.0
        %315 = vmatprep.subr.mxu0 0.0
        %316 = vmatpush1.msra.mxu0 0.0
        %317 = vmatprep.mubr.f32.mxu0 0.0
        %318 = vmatmul.mubr.f32.gmra.mrb[0].mxu0 %v233
        %v319 = vpop.f32.mrb[0].mxu0
        %v320 = vadd.f32 0.0, %v319
        %v321 = vpop.f32.mrb[0].mxu0
        %322 = vmatprep.mubr.f32.mxu0 0.0
        %323 = vmatmul.mubr.f32.gmra.mrb[0].mxu0 %v234
        %v324 = vpop.f32.mrb[0].mxu0
        %v325 = vadd.f32 0.0, %v324
        %v326 = vpop.f32.mrb[0].mxu0
        %327 = vmatprep.mubr.f32.mxu0 0.0
        %328 = vmatmul.mubr.f32.gmra.mrb[0].mxu0 %v235
        %v329 = vpop.f32.mrb[0].mxu0
        %v330 = vadd.f32 0.0, %v329
        %v331 = vpop.f32.mrb[0].mxu0
        %332 = vmatprep.mubr.f32.mxu0 0.0
        %333 = vmatmul.mubr.f32.gmra.mrb[0].mxu0 %v236
        %v334 = vpop.f32.mrb[0].mxu0
        %v335 = vadd.f32 0.0, %v334
        %v336 = vpop.f32.mrb[0].mxu0
        %337 = vdwg.mxu0
        %v338 = vld [vmem:[%s2] sm:$0x1]
        %v339 = vld [vmem:[%s3] sm:$0x1]
        %340 = vadd.xlane.f32.xlu0 %v320
        %v341 = vpop.xlane.xlu0 %340
        %342 = vadd.xlane.f32.xlu0 %v325
        %v343 = vpop.xlane.xlu0 %342
        %344 = vadd.xlane.f32.xlu0 %v330
        %v345 = vpop.xlane.xlu0 %344
        %346 = vadd.xlane.f32.xlu0 %v335
        %v347 = vpop.xlane.xlu0 %346
        %v348 = vmul.f32 %v320, %v320
        %v349 = vmul.f32 %v325, %v325
        %v350 = vmul.f32 %v330, %v330
        %v351 = vmul.f32 %v335, %v335
        %352 = vadd.xlane.f32.xlu0 %v348
        %v353 = vpop.xlane.xlu0 %352
        %354 = vadd.xlane.f32.xlu0 %v349
        %v355 = vpop.xlane.xlu0 %354
        %356 = vadd.xlane.f32.xlu0 %v350
        %v357 = vpop.xlane.xlu0 %356
        %358 = vadd.xlane.f32.xlu0 %v351
        %v359 = vpop.xlane.xlu0 %358
        %v360 = vmul.f32 %v341, 0.0078125
        %v361 = vmul.f32 %v343, 0.0078125
        %v362 = vmul.f32 %v345, 0.0078125
        %v363 = vmul.f32 %v347, 0.0078125
        %v364 = vmul.f32 %v353, 0.0078125
        %v365 = vmul.f32 %v355, 0.0078125
        %v366 = vmul.f32 %v357, 0.0078125
        %v367 = vmul.f32 %v359, 0.0078125
        %v368 = vmul.f32 %v360, %v360
        %v369 = vmul.f32 %v361, %v361
        %v370 = vmul.f32 %v362, %v362
        %v371 = vmul.f32 %v363, %v363
        %v372 = vsub.f32 %v364, %v368
        %v373 = vsub.f32 %v365, %v369
        %v374 = vsub.f32 %v366, %v370
        %v375 = vsub.f32 %v367, %v371
        %v376 = vsub.f32 %v320, %v360
        %v377 = vsub.f32 %v325, %v361
        %v378 = vsub.f32 %v330, %v362
        %v379 = vsub.f32 %v335, %v363
        %v380 = vadd.f32 %v372, 1e-05
        %v381 = vadd.f32 %v373, 1e-05
        %v382 = vadd.f32 %v374, 1e-05
        %v383 = vadd.f32 %v375, 1e-05
        %v384 = vrsqrt.pop %v380
        %v385 = vrsqrt.pop %v381
        %v386 = vrsqrt.pop %v382
        %v387 = vrsqrt.pop %v383
        %v388 = vmul.f32 %v376, %v384
        %v389 = vmul.f32 %v377, %v385
        %v390 = vmul.f32 %v378, %v386
        %v391 = vmul.f32 %v379, %v387
        %v393 = vlaneseq
        %v394 = vshrl.u32 %v393, 7
        %v395 = vsub.s32 0, %v394
        %v396 = vrot.slane %v338, %v395
        %v398 = vmul.f32 %v388, %v396
        %v399 = vmul.f32 %v389, %v396
        %v400 = vmul.f32 %v390, %v396
        %v401 = vmul.f32 %v391, %v396
        %v403 = vlaneseq
        %v404 = vshrl.u32 %v403, 7
        %v405 = vsub.s32 0, %v404
        %v406 = vrot.slane %v339, %v405
        %v408 = vadd.f32 %v398, %v406
        %v409 = vadd.f32 %v399, %v406
        %v410 = vadd.f32 %v400, %v406
        %v411 = vadd.f32 %v401, %v406
        %v412 = vmax.f32 %v408, 0.0
        %v413 = vmax.f32 %v409, 0.0
        %v414 = vmax.f32 %v410, 0.0
        %v415 = vmax.f32 %v411, 0.0
        %416 = vst [vmem:[%s230] sm:$0xff] %v412
        %417 = vst [vmem:[%s230 + $0x8] sm:$0xff] %v413
        %418 = vst [vmem:[%s230 + $0x10] sm:$0xff] %v414
        %419 = vst [vmem:[%s230 + $0x18] sm:$0xff] %v415
        %s420 = sand.u32 %s119, 1
        %s421 = scalar_lea.sflag [#allocation4], %s420
        %s422 = sand.u32 %s119, 1
        %s423 = smul.addr %s422, 32
        %s424 = scalar_lea.vmem [#allocation7], %s423
        // Predicated region
        $region45: #{tpu_custom_call.1} parent=35 // pred_check
          %p425 = pneg %p129
        $region46: #{tpu_custom_call.1} parent=35 // pred_check_branch
          %427 = sbr.rel (%p425) target = $region48
        $region47: #{tpu_custom_call.1} parent=35 // pred_region
          %s428 = smul.u32 4, %s22
          %s430 = ssub.s32 512, 512
          %431 = vsyncadd %s421, %s430
          %s432 = smul.addr %s428, 128
          %s433 = scalar_lea.hbm %s4, %s432
          %s434 = sshll.u32 %s424, 4
          %s435 = int_to_ptr.vmem [resolvable:$true] %s434
          %440 = dma.vmem_to_hbm [thread:$0]  %s435, 512, %s433, %s421, 128, 128, 8
        $region48: #{tpu_custom_call.1} parent=35 // pred_fallthru
          _
      $region36: #{tpu_custom_call.1} parent=5 // pred_fallthru
        _
      %p441 = scmp.le.s32.totalorder 2, %s17
      // Predicated region
      $region49: #{tpu_custom_call.1} parent=5 // pred_check
        %p442 = pneg %p441
      $region50: #{tpu_custom_call.1} parent=5 // pred_check_branch
        %444 = sbr.rel (%p442) target = $region52
      $region51: #{tpu_custom_call.1} parent=5 // pred_region
        %s445 = ssub.s32 %s17, 2
        // Predicated region
        $region53: #{tpu_custom_call.1} parent=51 // pred_check
          %p446 = pneg %p135
        $region54: #{tpu_custom_call.1} parent=51 // pred_check_branch
          %448 = sbr.rel (%p446) target = $region56
        $region55: #{tpu_custom_call.1} parent=51 // pred_region
          %s449 = sand.u32 %s120, 1
          %s450 = scalar_lea.sflag [#allocation4], %s449
          %s451 = sand.u32 %s120, 1
          %s452 = smul.addr %s451, 32
          %s453 = scalar_lea.vmem [#allocation7], %s452
          %454 = dma.done %s450, 512
        $region56: #{tpu_custom_call.1} parent=51 // pred_fallthru
          _
      $region52: #{tpu_custom_call.1} parent=5 // pred_fallthru
        _
    $region6: #{tpu_custom_call.1} parent=1 // loop_footer
      %s21 = sadd.s32 1, %s17
    $region7: #{tpu_custom_call.1} parent=1 // loop_footer_branch
      %16 = sbr.rel target = $region3
    $region8: #{tpu_custom_call.1} parent=1 // loop_exit
      _
    %455 = vsyncpa [#allocation3], 1
    %s456 = scalar_lea.sflag [#allocation3], 1
    %457 = vsyncpa %s456, 1
    %458 = vsyncpa [#allocation6], 1
    %459 = vsyncpa [#allocation4], 1
    %s460 = scalar_lea.sflag [#allocation4], 1
    %461 = vsyncpa %s460, 1

</llo_original>
